<compile_context>
chip_gen: v7x
topology: tpu7x:2x2x1
jax: 0.10.0
libtpu: 0.0.40
codegen_flags: <defaults>
</compile_context>

<pallas_src>
import jax
import jax.numpy as jnp
from jax.experimental import pallas as pl
from jax.experimental.pallas import tpu as pltpu


def se_kernel(x_ref, w1_ref, b1_ref, w2_ref, b2_ref, out_ref):
    # x_ref block: (B_blk, C, HW) -- B_blk samples, spatial flattened on lanes.

    # ---- global average pool over the spatial (lane) axis, f32 accumulate ----
    pooled = jnp.mean(x_ref[...], axis=2, dtype=jnp.float32)       # (B_blk, C)

    # ---- fc1 (1x1 conv as matmul) + bias + relu ----
    h = jnp.dot(pooled, w1_ref[...], preferred_element_type=jnp.float32)
    h = jnp.maximum(h + b1_ref[...], 0.0)                          # (B_blk, Cr)

    # ---- fc2 (1x1 conv as matmul) + bias + sigmoid ----
    s = jnp.dot(h, w2_ref[...], preferred_element_type=jnp.float32)
    s = jax.nn.sigmoid(s + b2_ref[...])                            # (B_blk, C)

    # ---- channel-wise rescale (per-sublane scalar broadcast along lanes) ----
    # Re-read x_ref (VMEM) instead of keeping an upcast copy live.
    scale = s.astype(x_ref.dtype)[:, :, None]
    out_ref[...] = (x_ref[...] * scale).astype(out_ref.dtype)


def _pick_block_batch(n, per_sample_bytes, vmem_data_budget_bytes):
    """Largest divisor of n that fits the VMEM budget and keeps >= 2 grid steps."""
    # 4 live data blocks per step: double-buffered input + double-buffered output.
    max_b = max(1, vmem_data_budget_bytes // (4 * per_sample_bytes))
    # Keep at least 2 grid steps so the "parallel" axis splits across v7x's 2 TCs.
    b = int(min(max_b, max(1, n // 2)))
    while n % b:
        b -= 1
    return b


def se_module_forward(x_nchw, params, *, vmem_data_budget_bytes=40 << 20):
    """SEModule forward. x_nchw: (N, C, H, W). Returns (N, C, H, W)."""
    N, C, H, W = x_nchw.shape
    HW = H * W
    Cr = params["fc1_w"].shape[1]

    x = x_nchw.reshape(N, C, HW)          # free reshape, no transpose/HBM pass

    per_sample_bytes = C * HW * x.dtype.itemsize
    b_blk = _pick_block_batch(N, per_sample_bytes, vmem_data_budget_bytes)
    grid = (N // b_blk,)

    out = pl.pallas_call(
        se_kernel,
        out_shape=jax.ShapeDtypeStruct((N, C, HW), x_nchw.dtype),
        grid=grid,
        in_specs=[
            pl.BlockSpec((b_blk, C, HW), lambda n: (n, 0, 0)),   # x: B_blk samples/step
            pl.BlockSpec((C, Cr), lambda n: (0, 0)),             # fc1 weight (VMEM-resident)
            pl.BlockSpec((1, Cr), lambda n: (0, 0)),             # fc1 bias
            pl.BlockSpec((Cr, C), lambda n: (0, 0)),             # fc2 weight
            pl.BlockSpec((1, C), lambda n: (0, 0)),              # fc2 bias
        ],
        out_specs=pl.BlockSpec((b_blk, C, HW), lambda n: (n, 0, 0)),
        compiler_params=pltpu.CompilerParams(
            dimension_semantics=("parallel",),
            vmem_limit_bytes=48 << 20,   # raise v5e/v6e scoped default, safe on v7x
        ),
    )(x, params["fc1_w"], params["fc1_b"], params["fc2_w"], params["fc2_b"])

    return out.reshape(N, C, H, W)


if __name__ == "__main__":
    # Small shapes consistent with the module: batch=8, planes=32, spatial 16x16,
    # reduction=4 (fc hidden = 8).  H*W = 256 is lane-dense; N=8 exercises the
    # multi-sample (B_blk=4, 2 grid steps) packing path.
    N, C, H, W = 8, 32, 16, 16
    reduction = 4
    Cr = C // reduction

    key = jax.random.PRNGKey(0)
    ks = jax.random.split(key, 5)

    x = jax.random.normal(ks[0], (N, C, H, W), jnp.float32)
    params = {
        "fc1_w": jax.random.normal(ks[1], (C, Cr), jnp.float32) * 0.1,
        "fc1_b": jax.random.normal(ks[2], (1, Cr), jnp.float32) * 0.1,
        "fc2_w": jax.random.normal(ks[3], (Cr, C), jnp.float32) * 0.1,
        "fc2_b": jax.random.normal(ks[4], (1, C), jnp.float32) * 0.1,
    }

    out = jax.jit(se_module_forward)(x, params)
    out = jax.block_until_ready(out)

    # Pure-JAX reference (same math as the PyTorch module).
    pooled = jnp.mean(x, axis=(2, 3))                              # (N, C)
    h_ref = jnp.maximum(pooled @ params["fc1_w"] + params["fc1_b"], 0.0)
    s_ref = jax.nn.sigmoid(h_ref @ params["fc2_w"] + params["fc2_b"])
    ref = x * s_ref[:, :, None, None]

    assert out.shape == (N, C, H, W)
    assert bool(jnp.all(jnp.isfinite(out)))
    assert bool(jnp.allclose(out, ref, rtol=1e-5, atol=1e-5)), \
        float(jnp.max(jnp.abs(out - ref)))
    print("KERNEL_OK")
</pallas_src>

<mosaic_0001>
module attributes {stable_mosaic.version = 11 : i64} {
  func.func @se_kernel(%arg0: i32, %arg1: memref<4x32x256xf32, #tpu.memory_space<vmem>>, %arg2: memref<32x8xf32, #tpu.memory_space<vmem>>, %arg3: memref<1x8xf32, #tpu.memory_space<vmem>>, %arg4: memref<8x32xf32, #tpu.memory_space<vmem>>, %arg5: memref<1x32xf32, #tpu.memory_space<vmem>>, %arg6: memref<4x32x256xf32, #tpu.memory_space<vmem>>) attributes {dimension_semantics = [#tpu.dimension_semantics<parallel>], iteration_bounds = array<i64: 2>, scalar_prefetch = 0 : i64, scratch_operands = 0 : i64, tpu.core_type = #tpu.core_type<tc>, window_params = [{transform_indices = @transform_0, window_bounds = array<i64: 4, 32, 256>}, {pipeline_mode = #tpu.pipeline_mode<synchronous>, transform_indices = @transform_1, window_bounds = array<i64: 32, 8>}, {pipeline_mode = #tpu.pipeline_mode<synchronous>, transform_indices = @transform_2, window_bounds = array<i64: 1, 8>}, {pipeline_mode = #tpu.pipeline_mode<synchronous>, transform_indices = @transform_3, window_bounds = array<i64: 8, 32>}, {pipeline_mode = #tpu.pipeline_mode<synchronous>, transform_indices = @transform_4, window_bounds = array<i64: 1, 32>}, {transform_indices = @transform_5, window_bounds = array<i64: 4, 32, 256>}]} {
    %c0 = arith.constant 0 : index
    %c0_0 = arith.constant 0 : index
    %c0_1 = arith.constant 0 : index
    %0 = vector.load %arg1[%c0, %c0_0, %c0_1] : memref<4x32x256xf32, #tpu.memory_space<vmem>>, vector<4x32x256xf32>
    %cst = arith.constant dense<0.000000e+00> : vector<4x32xf32>
    %1 = vector.multi_reduction <add>, %0, %cst [2] : vector<4x32x256xf32> to vector<4x32xf32>
    %cst_2 = arith.constant 2.560000e+02 : f32
    %2 = vector.broadcast %cst_2 : f32 to vector<4x32xf32>
    %3 = arith.divf %1, %2 : vector<4x32xf32>
    %c0_3 = arith.constant 0 : index
    %c0_4 = arith.constant 0 : index
    %4 = vector.load %arg2[%c0_3, %c0_4] : memref<32x8xf32, #tpu.memory_space<vmem>>, vector<32x8xf32>
    %cst_5 = arith.constant dense<0.000000e+00> : vector<4x8xf32>
    %5 = tpu.matmul %3, %4, %cst_5 {dimension_numbers = #tpu.dot_dimension_numbers<[1], [0], [0], [1], [0, 0, 1, 1], [], []>} : vector<4x32xf32>, vector<32x8xf32>, vector<4x8xf32> -> vector<4x8xf32>
    %c0_6 = arith.constant 0 : index
    %c0_7 = arith.constant 0 : index
    %6 = vector.load %arg3[%c0_6, %c0_7] : memref<1x8xf32, #tpu.memory_space<vmem>>, vector<1x8xf32>
    %7 = vector.broadcast %6 : vector<1x8xf32> to vector<4x8xf32>
    %8 = arith.addf %5, %7 : vector<4x8xf32>
    %cst_8 = arith.constant 0.000000e+00 : f32
    %9 = vector.broadcast %cst_8 : f32 to vector<4x8xf32>
    %10 = arith.maximumf %8, %9 : vector<4x8xf32>
    %c0_9 = arith.constant 0 : index
    %c0_10 = arith.constant 0 : index
    %11 = vector.load %arg4[%c0_9, %c0_10] : memref<8x32xf32, #tpu.memory_space<vmem>>, vector<8x32xf32>
    %cst_11 = arith.constant dense<0.000000e+00> : vector<4x32xf32>
    %12 = tpu.matmul %10, %11, %cst_11 {dimension_numbers = #tpu.dot_dimension_numbers<[1], [0], [0], [1], [0, 0, 1, 1], [], []>} : vector<4x8xf32>, vector<8x32xf32>, vector<4x32xf32> -> vector<4x32xf32>
    %c0_12 = arith.constant 0 : index
    %c0_13 = arith.constant 0 : index
    %13 = vector.load %arg5[%c0_12, %c0_13] : memref<1x32xf32, #tpu.memory_space<vmem>>, vector<1x32xf32>
    %14 = vector.broadcast %13 : vector<1x32xf32> to vector<4x32xf32>
    %15 = arith.addf %12, %14 : vector<4x32xf32>
    %16 = arith.negf %15 : vector<4x32xf32>
    %17 = math.exp %16 : vector<4x32xf32>
    %cst_14 = arith.constant 1.000000e+00 : f32
    %18 = vector.broadcast %cst_14 : f32 to vector<4x32xf32>
    %19 = arith.addf %18, %17 : vector<4x32xf32>
    %20 = arith.divf %18, %19 : vector<4x32xf32>
    %21 = vector.shape_cast %20 : vector<4x32xf32> to vector<4x32x1xf32>
    %c0_15 = arith.constant 0 : index
    %c0_16 = arith.constant 0 : index
    %c0_17 = arith.constant 0 : index
    %22 = vector.load %arg1[%c0_15, %c0_16, %c0_17] : memref<4x32x256xf32, #tpu.memory_space<vmem>>, vector<4x32x256xf32>
    %23 = vector.broadcast %21 : vector<4x32x1xf32> to vector<4x32x256xf32>
    %24 = arith.mulf %22, %23 : vector<4x32x256xf32>
    %c0_18 = arith.constant 0 : index
    %c0_19 = arith.constant 0 : index
    %c0_20 = arith.constant 0 : index
    %25 = vector.load %arg6[%c0_18, %c0_19, %c0_20] : memref<4x32x256xf32, #tpu.memory_space<vmem>>, vector<4x32x256xf32>
    tpu.vector_store %arg6[%c0_18, %c0_19, %c0_20], %24 {strides = array<i32>} : memref<4x32x256xf32, #tpu.memory_space<vmem>>, vector<4x32x256xf32>,
    return
  }
  func.func @transform_0(%arg0: i32) -> (i32, i32, i32) {
    %c0_i32 = arith.constant 0 : i32
    %c0_i32_0 = arith.constant 0 : i32
    %c0_i32_1 = arith.constant 0 : i32
    return %arg0, %c0_i32, %c0_i32_0 : i32, i32, i32
  }
  func.func @transform_1(%arg0: i32) -> (i32, i32) {
    %c0_i32 = arith.constant 0 : i32
    %c0_i32_0 = arith.constant 0 : i32
    %c0_i32_1 = arith.constant 0 : i32
    return %c0_i32, %c0_i32_0 : i32, i32
  }
  func.func @transform_2(%arg0: i32) -> (i32, i32) {
    %c0_i32 = arith.constant 0 : i32
    %c0_i32_0 = arith.constant 0 : i32
    %c0_i32_1 = arith.constant 0 : i32
    return %c0_i32, %c0_i32_0 : i32, i32
  }
  func.func @transform_3(%arg0: i32) -> (i32, i32) {
    %c0_i32 = arith.constant 0 : i32
    %c0_i32_0 = arith.constant 0 : i32
    %c0_i32_1 = arith.constant 0 : i32
    return %c0_i32, %c0_i32_0 : i32, i32
  }
  func.func @transform_4(%arg0: i32) -> (i32, i32) {
    %c0_i32 = arith.constant 0 : i32
    %c0_i32_0 = arith.constant 0 : i32
    %c0_i32_1 = arith.constant 0 : i32
    return %c0_i32, %c0_i32_0 : i32, i32
  }
  func.func @transform_5(%arg0: i32) -> (i32, i32, i32) {
    %c0_i32 = arith.constant 0 : i32
    %c0_i32_0 = arith.constant 0 : i32
    %c0_i32_1 = arith.constant 0 : i32
    return %arg0, %c0_i32, %c0_i32_0 : i32, i32, i32
  }
}

</mosaic_0001>

<llo_original>
// kernel: se_module_forward.1
$region0: #{se_module_forward.1}
  #allocation0 [shape = 'u32[]', space=smem, size = 0x4, offset = 0x4, fixed_abs, tag = 'smem constant byte address 0x4 - core index']
  #allocation1 [shape = 'u32[144,128]{1,0:T(1,128)}', space=vmem, size = 0x12000, scoped, tag = 'internal scratch']
  %s0 = inlined_call_operand.vmem [shape: f32[8,32,256], index: 0, kind: input, shape index: {}]
  %s1 = inlined_call_operand.vmem [shape: f32[32,8], index: 1, kind: input, shape index: {}]
  %s2 = inlined_call_operand.vmem [shape: f32[1,8], index: 2, kind: input, shape index: {}]
  %s3 = inlined_call_operand.vmem [shape: f32[8,32], index: 3, kind: input, shape index: {}]
  %s4 = inlined_call_operand.vmem [shape: f32[1,32], index: 4, kind: input, shape index: {}]
  %s5 = inlined_call_operand.vmem [shape: f32[8,32,256], index: 5, kind: output, shape index: {}]
  %s6 = sld [smem:[#allocation0]]
  $region53: #{se_module_forward.1} parent=0
    _
  %s8 = ssub.s32 1, %s6
  %s9 = scalar_select 0, %s8, %s6
  loop: start=0, step=1, limit=4
  $region2: #{se_module_forward.1} parent=0 // loop_pre_header
    _
  $region3: #{se_module_forward.1} parent=0 // loop_header
    %s11 = sphi 0, %s15
    %p12 = scmp.ge.s32.totalorder %s11, 4
    %s21 = sphi 0, %s23
    %s24 = sphi 0, %s21
    %s25 = sphi 0, %s24
    %s41 = sphi 0, %s25
    %s45 = sphi 0, %s45
    %s47 = sphi 0, %s45
    %s48 = sphi 0, %s47
    %s62 = sphi 0, %s48
    %s66 = sphi 0, %s66
    %s68 = sphi 0, %s66
    %s69 = sphi 0, %s68
    %s83 = sphi 0, %s69
    %s87 = sphi 0, %s87
    %s89 = sphi 0, %s87
    %s90 = sphi 0, %s89
    %s104 = sphi 0, %s90
    %s108 = sphi 0, %s108
    %s110 = sphi 0, %s108
    %s111 = sphi 0, %s110
    %s125 = sphi 0, %s111
    %s131 = sphi 0, %s133
    %s134 = sphi 0, %s131
    %s135 = sphi 0, %s134
    %s151 = sphi 0, %s135
  $region4: #{se_module_forward.1} parent=0 // loop_header_branch
    %14 = sbr.rel (%p12) target = $region8
  $region5: #{se_module_forward.1} parent=0 // loop_body
    %s16 = ssub.s32 %s11, 1
    %s17 = ssub.s32 %s11, 2
    %s18 = sadd.s32 %s11, 1
    %s19 = ssub.s32 %s11, %s18
    %p20 = scmp.eq.s32.totalorder %s19, 0
    %s22 = sadd.s32 %s21, 1
    %s23 = scalar_select %p20, %s21, %s22
    %p26 = pneg %p20
    %p27 = scmp.eq.s32.totalorder %s11, 1
    %p28 = por %p26, %p27
    %p29 = scmp.ne.s32.totalorder %s21, %s24
    %p30 = scmp.eq.s32.totalorder %s11, 0
    %p31 = por %p29, %p30
    %p32 = scmp.ne.s32.totalorder %s21, %s24
    %p33 = scmp.eq.s32.totalorder %s16, 1
    %p34 = por %p32, %p33
    %p35 = scmp.ne.s32.totalorder %s24, %s25
    %p36 = scmp.eq.s32.totalorder %s16, 0
    %p37 = por %p35, %p36
    %p38 = scmp.ne.s32.totalorder %s24, %s25
    %p39 = scmp.eq.s32.totalorder %s17, 1
    %p40 = por %p38, %p39
    %p42 = scmp.ne.s32.totalorder %s25, %s41
    %p43 = scmp.eq.s32.totalorder %s17, 0
    %p44 = por %p42, %p43
    %s46 = sadd.s32 %s45, 1
    %p49 = scmp.eq.s32.totalorder %s11, 1
    %p50 = scmp.ne.s32.totalorder %s45, %s47
    %p51 = scmp.eq.s32.totalorder %s11, 0
    %p52 = por %p50, %p51
    %p53 = scmp.ne.s32.totalorder %s45, %s47
    %p54 = scmp.eq.s32.totalorder %s16, 1
    %p55 = por %p53, %p54
    %p56 = scmp.ne.s32.totalorder %s47, %s48
    %p57 = scmp.eq.s32.totalorder %s16, 0
    %p58 = por %p56, %p57
    %p59 = scmp.ne.s32.totalorder %s47, %s48
    %p60 = scmp.eq.s32.totalorder %s17, 1
    %p61 = por %p59, %p60
    %p63 = scmp.ne.s32.totalorder %s48, %s62
    %p64 = scmp.eq.s32.totalorder %s17, 0
    %p65 = por %p63, %p64
    %s67 = sadd.s32 %s66, 1
    %p70 = scmp.eq.s32.totalorder %s11, 1
    %p71 = scmp.ne.s32.totalorder %s66, %s68
    %p72 = scmp.eq.s32.totalorder %s11, 0
    %p73 = por %p71, %p72
    %p74 = scmp.ne.s32.totalorder %s66, %s68
    %p75 = scmp.eq.s32.totalorder %s16, 1
    %p76 = por %p74, %p75
    %p77 = scmp.ne.s32.totalorder %s68, %s69
    %p78 = scmp.eq.s32.totalorder %s16, 0
    %p79 = por %p77, %p78
    %p80 = scmp.ne.s32.totalorder %s68, %s69
    %p81 = scmp.eq.s32.totalorder %s17, 1
    %p82 = por %p80, %p81
    %p84 = scmp.ne.s32.totalorder %s69, %s83
    %p85 = scmp.eq.s32.totalorder %s17, 0
    %p86 = por %p84, %p85
    %s88 = sadd.s32 %s87, 1
    %p91 = scmp.eq.s32.totalorder %s11, 1
    %p92 = scmp.ne.s32.totalorder %s87, %s89
    %p93 = scmp.eq.s32.totalorder %s11, 0
    %p94 = por %p92, %p93
    %p95 = scmp.ne.s32.totalorder %s87, %s89
    %p96 = scmp.eq.s32.totalorder %s16, 1
    %p97 = por %p95, %p96
    %p98 = scmp.ne.s32.totalorder %s89, %s90
    %p99 = scmp.eq.s32.totalorder %s16, 0
    %p100 = por %p98, %p99
    %p101 = scmp.ne.s32.totalorder %s89, %s90
    %p102 = scmp.eq.s32.totalorder %s17, 1
    %p103 = por %p101, %p102
    %p105 = scmp.ne.s32.totalorder %s90, %s104
    %p106 = scmp.eq.s32.totalorder %s17, 0
    %p107 = por %p105, %p106
    %s109 = sadd.s32 %s108, 1
    %p112 = scmp.eq.s32.totalorder %s11, 1
    %p113 = scmp.ne.s32.totalorder %s108, %s110
    %p114 = scmp.eq.s32.totalorder %s11, 0
    %p115 = por %p113, %p114
    %p116 = scmp.ne.s32.totalorder %s108, %s110
    %p117 = scmp.eq.s32.totalorder %s16, 1
    %p118 = por %p116, %p117
    %p119 = scmp.ne.s32.totalorder %s110, %s111
    %p120 = scmp.eq.s32.totalorder %s16, 0
    %p121 = por %p119, %p120
    %p122 = scmp.ne.s32.totalorder %s110, %s111
    %p123 = scmp.eq.s32.totalorder %s17, 1
    %p124 = por %p122, %p123
    %p126 = scmp.ne.s32.totalorder %s111, %s125
    %p127 = scmp.eq.s32.totalorder %s17, 0
    %p128 = por %p126, %p127
    %s129 = ssub.s32 %s11, %s18
    %p130 = scmp.eq.s32.totalorder %s129, 0
    %s132 = sadd.s32 %s131, 1
    %s133 = scalar_select %p130, %s131, %s132
    %p136 = pneg %p130
    %p137 = scmp.eq.s32.totalorder %s11, 1
    %p138 = por %p136, %p137
    %p139 = scmp.ne.s32.totalorder %s131, %s134
    %p140 = scmp.eq.s32.totalorder %s11, 0
    %p141 = por %p139, %p140
    %p142 = scmp.ne.s32.totalorder %s131, %s134
    %p143 = scmp.eq.s32.totalorder %s16, 1
    %p144 = por %p142, %p143
    %p145 = scmp.ne.s32.totalorder %s134, %s135
    %p146 = scmp.eq.s32.totalorder %s16, 0
    %p147 = por %p145, %p146
    %p148 = scmp.ne.s32.totalorder %s134, %s135
    %p149 = scmp.eq.s32.totalorder %s17, 1
    %p150 = por %p148, %p149
    %p152 = scmp.ne.s32.totalorder %s135, %s151
    %p153 = scmp.eq.s32.totalorder %s17, 0
    %p154 = por %p152, %p153
    %p155 = scmp.le.s32.totalorder 1, %s11
    %p156 = scmp.lt.s32.totalorder %s11, 3
    %p157 = pnand %p155, %p156
    %p158 = pneg %p157
    // Predicated region
    $region9: #{se_module_forward.1} parent=5 // pred_check
      _
    $region10: #{se_module_forward.1} parent=5 // pred_check_branch
      %160 = sbr.rel (%p157) target = $region12
    $region11: #{se_module_forward.1} parent=5 // pred_region
      %s161 = ssub.s32 %s11, 1
      // Predicated region
      $region13: #{se_module_forward.1} parent=11 // pred_check
        %p162 = pneg %p58
      $region14: #{se_module_forward.1} parent=11 // pred_check_branch
        %164 = sbr.rel (%p162) target = $region16
      $region15: #{se_module_forward.1} parent=11 // pred_region
        _
      $region16: #{se_module_forward.1} parent=11 // pred_fallthru
        _
      // Predicated region
      $region17: #{se_module_forward.1} parent=11 // pred_check
        %p165 = pneg %p79
      $region18: #{se_module_forward.1} parent=11 // pred_check_branch
        %167 = sbr.rel (%p165) target = $region20
      $region19: #{se_module_forward.1} parent=11 // pred_region
        _
      $region20: #{se_module_forward.1} parent=11 // pred_fallthru
        _
      // Predicated region
      $region21: #{se_module_forward.1} parent=11 // pred_check
        %p168 = pneg %p100
      $region22: #{se_module_forward.1} parent=11 // pred_check_branch
        %170 = sbr.rel (%p168) target = $region24
      $region23: #{se_module_forward.1} parent=11 // pred_region
        _
      $region24: #{se_module_forward.1} parent=11 // pred_fallthru
        _
      // Predicated region
      $region25: #{se_module_forward.1} parent=11 // pred_check
        %p171 = pneg %p121
      $region26: #{se_module_forward.1} parent=11 // pred_check_branch
        %173 = sbr.rel (%p171) target = $region28
      $region27: #{se_module_forward.1} parent=11 // pred_region
        _
      $region28: #{se_module_forward.1} parent=11 // pred_fallthru
        _
    $region12: #{se_module_forward.1} parent=5 // pred_fallthru
      _
    %p174 = scmp.lt.s32.totalorder %s11, 2
    // Predicated region
    $region29: #{se_module_forward.1} parent=5 // pred_check
      %p175 = pneg %p174
    $region30: #{se_module_forward.1} parent=5 // pred_check_branch
      %177 = sbr.rel (%p175) target = $region32
    $region31: #{se_module_forward.1} parent=5 // pred_region
      // Predicated region
      $region33: #{se_module_forward.1} parent=31 // pred_check
        %p178 = pneg %p31
      $region34: #{se_module_forward.1} parent=31 // pred_check_branch
        %180 = sbr.rel (%p178) target = $region36
      $region35: #{se_module_forward.1} parent=31 // pred_region
        %s181 = smul.u32 4, %s11
        %p182 = scmp.lt.s32.totalorder %s181, 7
        %s183 = scalar_select %p182, %s181, 7
        %s184 = smul.addr %s183, 8
        %s185 = smul.addr %s184, 8
        %s186 = scalar_lea.vmem %s0, %s185
        %s187 = smul.u32 4, %s11
      $region36: #{se_module_forward.1} parent=31 // pred_fallthru
        _
    $region32: #{se_module_forward.1} parent=5 // pred_fallthru
      _
    %p188 = scmp.le.s32.totalorder 1, %s11
    %p189 = scmp.lt.s32.totalorder %s11, 3
    %p190 = pnand %p188, %p189
    %p191 = pneg %p190
    // Predicated region
    $region37: #{se_module_forward.1} parent=5 // pred_check
      _
    $region38: #{se_module_forward.1} parent=5 // pred_check_branch
      %193 = sbr.rel (%p190) target = $region40
    $region39: #{se_module_forward.1} parent=5 // pred_region
      %s194 = ssub.s32 %s11, 1
      %s195 = smul.u32 4, %s16
      %p196 = scmp.lt.s32.totalorder %s195, 7
      %s197 = scalar_select %p196, %s195, 7
      %s198 = smul.addr %s197, 8
      %s199 = smul.addr %s198, 8
      %s200 = scalar_lea.vmem %s0, %s199
      %p201 = pneg %p37
      %p202 = pneg %p34
      %p203 = pneg %p58
      %p204 = pneg %p55
      %p205 = pneg %p79
      %p206 = pneg %p76
      %p207 = pneg %p100
      %p208 = pneg %p97
      %p209 = pneg %p121
      %p210 = pneg %p118
      %p211 = pneg %p147
      %p212 = pneg %p144
      %s213 = smul.u32 4, %s16
      %p214 = scmp.lt.s32.totalorder %s213, 7
      %s215 = scalar_select %p214, %s213, 7
      %s216 = smul.addr %s215, 8
      %s217 = smul.addr %s216, 8
      %s218 = scalar_lea.vmem %s5, %s217
      %s219 = smul.u32 4, %s16
      %p220 = scmp.lt.s32.totalorder %s219, 7
      %s221 = scalar_select %p220, %s219, 7
      %s222 = smul.addr %s221, 8
      %s223 = smul.addr %s222, 8
      %s224 = scalar_lea.vmem %s0, %s223
      %s225 = smul.u32 4, %s16
      %s226 = smul.u32 4, %s16
      %p227 = scmp.lt.s32.totalorder %s226, 7
      %s228 = scalar_select %p227, %s226, 7
      %s229 = smul.addr %s228, 8
      %s230 = smul.addr %s229, 8
      %s231 = scalar_lea.vmem %s5, %s230
      %s232 = smul.u32 4, %s16
      %v233 = vld [vmem:[%s224] sm:$0xff]
      %v234 = vld [vmem:[%s224 + $0x8] sm:$0xff]
      %v235 = vld [vmem:[%s224 + $0x10] sm:$0xff]
      %v236 = vld [vmem:[%s224 + $0x18] sm:$0xff]
      %v237 = vld [vmem:[%s224 + $0x20] sm:$0xff]
      %v238 = vld [vmem:[%s224 + $0x28] sm:$0xff]
      %v239 = vld [vmem:[%s224 + $0x30] sm:$0xff]
      %v240 = vld [vmem:[%s224 + $0x38] sm:$0xff]
      %v241 = vld [vmem:[%s224 + $0x40] sm:$0xff]
      %v242 = vld [vmem:[%s224 + $0x48] sm:$0xff]
      %v243 = vld [vmem:[%s224 + $0x50] sm:$0xff]
      %v244 = vld [vmem:[%s224 + $0x58] sm:$0xff]
      %v245 = vld [vmem:[%s224 + $0x60] sm:$0xff]
      %v246 = vld [vmem:[%s224 + $0x68] sm:$0xff]
      %v247 = vld [vmem:[%s224 + $0x70] sm:$0xff]
      %v248 = vld [vmem:[%s224 + $0x78] sm:$0xff]
      %v249 = vld [vmem:[%s224 + $0x80] sm:$0xff]
      %v250 = vld [vmem:[%s224 + $0x88] sm:$0xff]
      %v251 = vld [vmem:[%s224 + $0x90] sm:$0xff]
      %v252 = vld [vmem:[%s224 + $0x98] sm:$0xff]
      %v253 = vld [vmem:[%s224 + $0xa0] sm:$0xff]
      %v254 = vld [vmem:[%s224 + $0xa8] sm:$0xff]
      %v255 = vld [vmem:[%s224 + $0xb0] sm:$0xff]
      %v256 = vld [vmem:[%s224 + $0xb8] sm:$0xff]
      %v257 = vld [vmem:[%s224 + $0xc0] sm:$0xff]
      %v258 = vld [vmem:[%s224 + $0xc8] sm:$0xff]
      %v259 = vld [vmem:[%s224 + $0xd0] sm:$0xff]
      %v260 = vld [vmem:[%s224 + $0xd8] sm:$0xff]
      %v261 = vld [vmem:[%s224 + $0xe0] sm:$0xff]
      %v262 = vld [vmem:[%s224 + $0xe8] sm:$0xff]
      %v263 = vld [vmem:[%s224 + $0xf0] sm:$0xff]
      %v264 = vld [vmem:[%s224 + $0xf8] sm:$0xff]
      %v265 = vadd.f32 %v233, %v234
      %266 = vadd.xlane.f32.xlu0 %v265
      %v267 = vpop.xlane.xlu0 %266
      %v268 = vadd.f32 %v235, %v236
      %269 = vadd.xlane.f32.xlu0 %v268
      %v270 = vpop.xlane.xlu0 %269
      %v271 = vadd.f32 %v237, %v238
      %272 = vadd.xlane.f32.xlu0 %v271
      %v273 = vpop.xlane.xlu0 %272
      %v274 = vadd.f32 %v239, %v240
      %275 = vadd.xlane.f32.xlu0 %v274
      %v276 = vpop.xlane.xlu0 %275
      %v277 = vadd.f32 %v241, %v242
      %278 = vadd.xlane.f32.xlu0 %v277
      %v279 = vpop.xlane.xlu0 %278
      %v280 = vadd.f32 %v243, %v244
      %281 = vadd.xlane.f32.xlu0 %v280
      %v282 = vpop.xlane.xlu0 %281
      %v283 = vadd.f32 %v245, %v246
      %284 = vadd.xlane.f32.xlu0 %v283
      %v285 = vpop.xlane.xlu0 %284
      %v286 = vadd.f32 %v247, %v248
      %287 = vadd.xlane.f32.xlu0 %v286
      %v288 = vpop.xlane.xlu0 %287
      %v289 = vadd.f32 %v249, %v250
      %290 = vadd.xlane.f32.xlu0 %v289
      %v291 = vpop.xlane.xlu0 %290
      %v292 = vadd.f32 %v251, %v252
      %293 = vadd.xlane.f32.xlu0 %v292
      %v294 = vpop.xlane.xlu0 %293
      %v295 = vadd.f32 %v253, %v254
      %296 = vadd.xlane.f32.xlu0 %v295
      %v297 = vpop.xlane.xlu0 %296
      %v298 = vadd.f32 %v255, %v256
      %299 = vadd.xlane.f32.xlu0 %v298
      %v300 = vpop.xlane.xlu0 %299
      %v301 = vadd.f32 %v257, %v258
      %302 = vadd.xlane.f32.xlu0 %v301
      %v303 = vpop.xlane.xlu0 %302
      %v304 = vadd.f32 %v259, %v260
      %305 = vadd.xlane.f32.xlu0 %v304
      %v306 = vpop.xlane.xlu0 %305
      %v307 = vadd.f32 %v261, %v262
      %308 = vadd.xlane.f32.xlu0 %v307
      %v309 = vpop.xlane.xlu0 %308
      %v310 = vadd.f32 %v263, %v264
      %311 = vadd.xlane.f32.xlu0 %v310
      %v312 = vpop.xlane.xlu0 %311
      %v313 = vrcp.pop 256.0
      %v314 = vmul.f32 %v267, %v313
      %v315 = vmul.f32 %v270, %v313
      %v316 = vmul.f32 %v273, %v313
      %v317 = vmul.f32 %v276, %v313
      %v318 = vmul.f32 %v279, %v313
      %v319 = vmul.f32 %v282, %v313
      %v320 = vmul.f32 %v285, %v313
      %v321 = vmul.f32 %v288, %v313
      %v322 = vmul.f32 %v291, %v313
      %v323 = vmul.f32 %v294, %v313
      %v324 = vmul.f32 %v297, %v313
      %v325 = vmul.f32 %v300, %v313
      %v326 = vmul.f32 %v303, %v313
      %v327 = vmul.f32 %v306, %v313
      %v328 = vmul.f32 %v309, %v313
      %v329 = vmul.f32 %v312, %v313
      %v330 = vld [vmem:[%s1] sm:$0xff]
      %v331 = vld [vmem:[%s1 + $0x8] sm:$0xff]
      %v332 = vld [vmem:[%s1 + $0x10] sm:$0xff]
      %v333 = vld [vmem:[%s1 + $0x18] sm:$0xff]
      %v334 = vld [vmem:[%s2] sm:$0x1]
      %v336 = vlaneseq
      %v337 = vshrl.u32 %v336, 7
      %v338 = vsub.s32 0, %v337
      %v339 = vrot.slane %v334, %v338
      %v357 = vlaneseq
      %v358 = vand.u32 %v357, 127
      %v359 = vlaneseq
      %v360 = vshrl.u32 %v359, 7
      %v361 = vsub.s32 %v358, %v360
      %v362 = vrot.slane %v314, %v361
      %v363 = vadd.s32 %v358, 4294967288
      %v364 = vlaneseq
      %v365 = vshrl.u32 %v364, 7
      %v366 = vsub.s32 %v363, %v365
      %v367 = vrot.slane %v315, %v366
      %vm368 = vcmask 130112
      %v369 = vsel %vm368, %v367, %v362
      %v370 = vadd.s32 %v358, 4294967280
      %v371 = vlaneseq
      %v372 = vshrl.u32 %v371, 7
      %v373 = vsub.s32 %v370, %v372
      %v374 = vrot.slane %v316, %v373
      %vm375 = vcmask 195712
      %v376 = vsel %vm375, %v374, %v369
      %v377 = vadd.s32 %v358, 4294967272
      %v378 = vlaneseq
      %v379 = vshrl.u32 %v378, 7
      %v380 = vsub.s32 %v377, %v379
      %v381 = vrot.slane %v317, %v380
      %vm382 = vcmask 261312
      %v383 = vsel %vm382, %v381, %v376
      %v384 = vlaneseq
      %v385 = vshrl.u32 %v384, 7
      %v386 = vsub.s32 %v358, %v385
      %v387 = vrot.slane %v318, %v386
      %v388 = vlaneseq
      %v389 = vshrl.u32 %v388, 7
      %v390 = vsub.s32 %v363, %v389
      %v391 = vrot.slane %v319, %v390
      %v392 = vsel %vm368, %v391, %v387
      %v393 = vlaneseq
      %v394 = vshrl.u32 %v393, 7
      %v395 = vsub.s32 %v370, %v394
      %v396 = vrot.slane %v320, %v395
      %v397 = vsel %vm375, %v396, %v392
      %v398 = vlaneseq
      %v399 = vshrl.u32 %v398, 7
      %v400 = vsub.s32 %v377, %v399
      %v401 = vrot.slane %v321, %v400
      %v402 = vsel %vm382, %v401, %v397
      %v403 = vlaneseq
      %v404 = vshrl.u32 %v403, 7
      %v405 = vsub.s32 %v358, %v404
      %v406 = vrot.slane %v322, %v405
      %v407 = vlaneseq
      %v408 = vshrl.u32 %v407, 7
      %v409 = vsub.s32 %v363, %v408
      %v410 = vrot.slane %v323, %v409
      %v411 = vsel %vm368, %v410, %v406
      %v412 = vlaneseq
      %v413 = vshrl.u32 %v412, 7
      %v414 = vsub.s32 %v370, %v413
      %v415 = vrot.slane %v324, %v414
      %v416 = vsel %vm375, %v415, %v411
      %v417 = vlaneseq
      %v418 = vshrl.u32 %v417, 7
      %v419 = vsub.s32 %v377, %v418
      %v420 = vrot.slane %v325, %v419
      %v421 = vsel %vm382, %v420, %v416
      %v422 = vlaneseq
      %v423 = vshrl.u32 %v422, 7
      %v424 = vsub.s32 %v358, %v423
      %v425 = vrot.slane %v326, %v424
      %v426 = vlaneseq
      %v427 = vshrl.u32 %v426, 7
      %v428 = vsub.s32 %v363, %v427
      %v429 = vrot.slane %v327, %v428
      %v430 = vsel %vm368, %v429, %v425
      %v431 = vlaneseq
      %v432 = vshrl.u32 %v431, 7
      %v433 = vsub.s32 %v370, %v432
      %v434 = vrot.slane %v328, %v433
      %v435 = vsel %vm375, %v434, %v430
      %v436 = vlaneseq
      %v437 = vshrl.u32 %v436, 7
      %v438 = vsub.s32 %v377, %v437
      %v439 = vrot.slane %v329, %v438
      %v440 = vsel %vm382, %v439, %v435
      %vm441 = vcmask 1041409
      %v442 = vsel %vm441, %v402, %v383
      %vm443 = vcmask 1042434
      %v444 = vsel %vm443, %v421, %v442
      %vm445 = vcmask 1043459
      %v446 = vsel %vm445, %v440, %v444
      %vm447 = vcmask 261120
      %v448 = vsel %vm447, %v446, 0
      %450 = vmatprep.subr.mxu0 0.0
      %451 = vmatpush1.msra.mxu0 %v330
      %452 = vmatprep.subr.mxu0 0.0
      %453 = vmatpush1.msra.mxu0 %v331
      %454 = vmatprep.subr.mxu0 0.0
      %455 = vmatpush1.msra.mxu0 %v332
      %456 = vmatprep.subr.mxu0 0.0
      %457 = vmatpush1.msra.mxu0 %v333
      %458 = vmatprep.subr.mxu0 0.0
      %459 = vmatpush1.msra.mxu0 0.0
      %460 = vmatprep.subr.mxu0 0.0
      %461 = vmatpush1.msra.mxu0 0.0
      %462 = vmatprep.subr.mxu0 0.0
      %463 = vmatpush1.msra.mxu0 0.0
      %464 = vmatprep.subr.mxu0 0.0
      %465 = vmatpush1.msra.mxu0 0.0
      %466 = vmatprep.subr.mxu0 0.0
      %467 = vmatpush1.msra.mxu0 0.0
      %468 = vmatprep.subr.mxu0 0.0
      %469 = vmatpush1.msra.mxu0 0.0
      %470 = vmatprep.subr.mxu0 0.0
      %471 = vmatpush1.msra.mxu0 0.0
      %472 = vmatprep.subr.mxu0 0.0
      %473 = vmatpush1.msra.mxu0 0.0
      %474 = vmatprep.subr.mxu0 0.0
      %475 = vmatpush1.msra.mxu0 0.0
      %476 = vmatprep.subr.mxu0 0.0
      %477 = vmatpush1.msra.mxu0 0.0
      %478 = vmatprep.subr.mxu0 0.0
      %479 = vmatpush1.msra.mxu0 0.0
      %480 = vmatprep.subr.mxu0 0.0
      %481 = vmatpush1.msra.mxu0 0.0
      %482 = vmatprep.subr.mxu0 0.0
      %483 = vmatpush1.msra.mxu0 0.0
      %484 = vmatprep.subr.mxu0 0.0
      %485 = vmatpush1.msra.mxu0 0.0
      %486 = vmatprep.subr.mxu0 0.0
      %487 = vmatpush1.msra.mxu0 0.0
      %488 = vmatprep.subr.mxu0 0.0
      %489 = vmatpush1.msra.mxu0 0.0
      %490 = vmatprep.subr.mxu0 0.0
      %491 = vmatpush1.msra.mxu0 0.0
      %492 = vmatprep.subr.mxu0 0.0
      %493 = vmatpush1.msra.mxu0 0.0
      %494 = vmatprep.subr.mxu0 0.0
      %495 = vmatpush1.msra.mxu0 0.0
      %496 = vmatprep.subr.mxu0 0.0
      %497 = vmatpush1.msra.mxu0 0.0
      %498 = vmatprep.subr.mxu0 0.0
      %499 = vmatpush1.msra.mxu0 0.0
      %500 = vmatprep.subr.mxu0 0.0
      %501 = vmatpush1.msra.mxu0 0.0
      %502 = vmatprep.subr.mxu0 0.0
      %503 = vmatpush1.msra.mxu0 0.0
      %504 = vmatprep.subr.mxu0 0.0
      %505 = vmatpush1.msra.mxu0 0.0
      %506 = vmatprep.subr.mxu0 0.0
      %507 = vmatpush1.msra.mxu0 0.0
      %508 = vmatprep.subr.mxu0 0.0
      %509 = vmatpush1.msra.mxu0 0.0
      %510 = vmatprep.subr.mxu0 0.0
      %511 = vmatpush1.msra.mxu0 0.0
      %512 = vmatprep.subr.mxu0 0.0
      %513 = vmatpush1.msra.mxu0 0.0
      %514 = vmatprep.mubr.f32.mxu0 0.0
      %515 = vmatmul.mubr.f32.gmra.mrb[0].mxu0 %v448
      %v516 = vpop.f32.mrb[0].mxu0
      %v517 = vadd.f32 %v339, %v516
      %v518 = vpop.f32.mrb[0].mxu0
      %519 = vdwg.mxu0
      %v520 = vmax.f32 %v517, 0.0
      %v521 = vld [vmem:[%s3] sm:$0xff]
      %v522 = vld [vmem:[%s4] sm:$0x1]
      %v524 = vlaneseq
      %v525 = vshrl.u32 %v524, 7
      %v526 = vsub.s32 0, %v525
      %v527 = vrot.slane %v522, %v526
      %vm529 = vcmask 64512
      %v531 = vsel %vm529, %v520, 0
      %533 = vmatprep.subr.mxu0 0.0
      %534 = vmatpush1.msra.mxu0 %v521
      %535 = vmatprep.subr.mxu0 0.0
      %536 = vmatpush1.msra.mxu0 0.0
      %537 = vmatprep.subr.mxu0 0.0
      %538 = vmatpush1.msra.mxu0 0.0
      %539 = vmatprep.subr.mxu0 0.0
      %540 = vmatpush1.msra.mxu0 0.0
      %541 = vmatprep.subr.mxu0 0.0
      %542 = vmatpush1.msra.mxu0 0.0
      %543 = vmatprep.subr.mxu0 0.0
      %544 = vmatpush1.msra.mxu0 0.0
      %545 = vmatprep.subr.mxu0 0.0
      %546 = vmatpush1.msra.mxu0 0.0
      %547 = vmatprep.subr.mxu0 0.0
      %548 = vmatpush1.msra.mxu0 0.0
      %549 = vmatprep.subr.mxu0 0.0
      %550 = vmatpush1.msra.mxu0 0.0
      %551 = vmatprep.subr.mxu0 0.0
      %552 = vmatpush1.msra.mxu0 0.0
      %553 = vmatprep.subr.mxu0 0.0
      %554 = vmatpush1.msra.mxu0 0.0
      %555 = vmatprep.subr.mxu0 0.0
      %556 = vmatpush1.msra.mxu0 0.0
      %557 = vmatprep.subr.mxu0 0.0
      %558 = vmatpush1.msra.mxu0 0.0
      %559 = vmatprep.subr.mxu0 0.0
      %560 = vmatpush1.msra.mxu0 0.0
      %561 = vmatprep.subr.mxu0 0.0
      %562 = vmatpush1.msra.mxu0 0.0
      %563 = vmatprep.subr.mxu0 0.0
      %564 = vmatpush1.msra.mxu0 0.0
      %565 = vmatprep.subr.mxu0 0.0
      %566 = vmatpush1.msra.mxu0 0.0
      %567 = vmatprep.subr.mxu0 0.0
      %568 = vmatpush1.msra.mxu0 0.0
      %569 = vmatprep.subr.mxu0 0.0
      %570 = vmatpush1.msra.mxu0 0.0
      %571 = vmatprep.subr.mxu0 0.0
      %572 = vmatpush1.msra.mxu0 0.0
      %573 = vmatprep.subr.mxu0 0.0
      %574 = vmatpush1.msra.mxu0 0.0
      %575 = vmatprep.subr.mxu0 0.0
      %576 = vmatpush1.msra.mxu0 0.0
      %577 = vmatprep.subr.mxu0 0.0
      %578 = vmatpush1.msra.mxu0 0.0
      %579 = vmatprep.subr.mxu0 0.0
      %580 = vmatpush1.msra.mxu0 0.0
      %581 = vmatprep.subr.mxu0 0.0
      %582 = vmatpush1.msra.mxu0 0.0
      %583 = vmatprep.subr.mxu0 0.0
      %584 = vmatpush1.msra.mxu0 0.0
      %585 = vmatprep.subr.mxu0 0.0
      %586 = vmatpush1.msra.mxu0 0.0
      %587 = vmatprep.subr.mxu0 0.0
      %588 = vmatpush1.msra.mxu0 0.0
      %589 = vmatprep.subr.mxu0 0.0
      %590 = vmatpush1.msra.mxu0 0.0
      %591 = vmatprep.subr.mxu0 0.0
      %592 = vmatpush1.msra.mxu0 0.0
      %593 = vmatprep.subr.mxu0 0.0
      %594 = vmatpush1.msra.mxu0 0.0
      %595 = vmatprep.subr.mxu0 0.0
      %596 = vmatpush1.msra.mxu0 0.0
      %597 = vmatprep.mubr.f32.mxu0 0.0
      %598 = vmatmul.mubr.f32.gmra.mrb[0].mxu0 %v531
      %v599 = vpop.f32.mrb[0].mxu0
      %v600 = vadd.f32 %v527, %v599
      %v601 = vpop.f32.mrb[0].mxu0
      %602 = vdwg.mxu0
      %v603 = vxor.u32 %v600, 2147483648
      %v604 = vmul.f32 %v603, 1.442695
      %v605 = vpow.pop %v604
      %v606 = vadd.f32 %v605, 1.0
      %v607 = vrcp.pop %v606
      %v608 = vmul.f32 1.0, %v607
      %v609 = vlaneseq
      %v610 = vshrl.u32 %v609, 7
      %v611 = vsub.s32 0, %v610
      %v612 = vrot.slane %v608, %v611
      %614 = vbcast.lane.b32.xlu0 %v612, 256
      %v615 = vpop.permute.xlu0 %614
      %s617 = sor.u32 256, 8
      %618 = vbcast.lane.b32.xlu0 %v612, %s617
      %v619 = vpop.permute.xlu0 %618
      %s621 = sor.u32 256, 16
      %622 = vbcast.lane.b32.xlu0 %v612, %s621
      %v623 = vpop.permute.xlu0 %622
      %s625 = sor.u32 256, 24
      %626 = vbcast.lane.b32.xlu0 %v612, %s625
      %v627 = vpop.permute.xlu0 %626
      %v628 = vlaneseq
      %v629 = vshrl.u32 %v628, 7
      %v630 = vsub.s32 1, %v629
      %v631 = vrot.slane %v608, %v630
      %633 = vbcast.lane.b32.xlu0 %v631, 256
      %v634 = vpop.permute.xlu0 %633
      %s636 = sor.u32 256, 8
      %637 = vbcast.lane.b32.xlu0 %v631, %s636
      %v638 = vpop.permute.xlu0 %637
      %s640 = sor.u32 256, 16
      %641 = vbcast.lane.b32.xlu0 %v631, %s640
      %v642 = vpop.permute.xlu0 %641
      %s644 = sor.u32 256, 24
      %645 = vbcast.lane.b32.xlu0 %v631, %s644
      %v646 = vpop.permute.xlu0 %645
      %v647 = vlaneseq
      %v648 = vshrl.u32 %v647, 7
      %v649 = vsub.s32 2, %v648
      %v650 = vrot.slane %v608, %v649
      %652 = vbcast.lane.b32.xlu0 %v650, 256
      %v653 = vpop.permute.xlu0 %652
      %s655 = sor.u32 256, 8
      %656 = vbcast.lane.b32.xlu0 %v650, %s655
      %v657 = vpop.permute.xlu0 %656
      %s659 = sor.u32 256, 16
      %660 = vbcast.lane.b32.xlu0 %v650, %s659
      %v661 = vpop.permute.xlu0 %660
      %s663 = sor.u32 256, 24
      %664 = vbcast.lane.b32.xlu0 %v650, %s663
      %v665 = vpop.permute.xlu0 %664
      %v666 = vlaneseq
      %v667 = vshrl.u32 %v666, 7
      %v668 = vsub.s32 3, %v667
      %v669 = vrot.slane %v608, %v668
      %671 = vbcast.lane.b32.xlu0 %v669, 256
      %v672 = vpop.permute.xlu0 %671
      %s674 = sor.u32 256, 8
      %675 = vbcast.lane.b32.xlu0 %v669, %s674
      %v676 = vpop.permute.xlu0 %675
      %s678 = sor.u32 256, 16
      %679 = vbcast.lane.b32.xlu0 %v669, %s678
      %v680 = vpop.permute.xlu0 %679
      %s682 = sor.u32 256, 24
      %683 = vbcast.lane.b32.xlu0 %v669, %s682
      %v684 = vpop.permute.xlu0 %683
      %v685 = vmul.f32 %v233, %v615
      %v686 = vmul.f32 %v234, %v615
      %v687 = vmul.f32 %v235, %v619
      %v688 = vmul.f32 %v236, %v619
      %v689 = vmul.f32 %v237, %v623
      %v690 = vmul.f32 %v238, %v623
      %v691 = vmul.f32 %v239, %v627
      %v692 = vmul.f32 %v240, %v627
      %v693 = vmul.f32 %v241, %v634
      %v694 = vmul.f32 %v242, %v634
      %v695 = vmul.f32 %v243, %v638
      %v696 = vmul.f32 %v244, %v638
      %v697 = vmul.f32 %v245, %v642
      %v698 = vmul.f32 %v246, %v642
      %v699 = vmul.f32 %v247, %v646
      %v700 = vmul.f32 %v248, %v646
      %v701 = vmul.f32 %v249, %v653
      %v702 = vmul.f32 %v250, %v653
      %v703 = vmul.f32 %v251, %v657
      %v704 = vmul.f32 %v252, %v657
      %v705 = vmul.f32 %v253, %v661
      %v706 = vmul.f32 %v254, %v661
      %v707 = vmul.f32 %v255, %v665
      %v708 = vmul.f32 %v256, %v665
      %v709 = vmul.f32 %v257, %v672
      %v710 = vmul.f32 %v258, %v672
      %v711 = vmul.f32 %v259, %v676
      %v712 = vmul.f32 %v260, %v676
      %v713 = vmul.f32 %v261, %v680
      %v714 = vmul.f32 %v262, %v680
      %v715 = vmul.f32 %v263, %v684
      %v716 = vmul.f32 %v264, %v684
      %717 = vst [vmem:[%s231] sm:$0xff] %v685
      %718 = vst [vmem:[%s231 + $0x8] sm:$0xff] %v686
      %719 = vst [vmem:[%s231 + $0x10] sm:$0xff] %v687
      %720 = vst [vmem:[%s231 + $0x18] sm:$0xff] %v688
      %721 = vst [vmem:[%s231 + $0x20] sm:$0xff] %v689
      %722 = vst [vmem:[%s231 + $0x28] sm:$0xff] %v690
      %723 = vst [vmem:[%s231 + $0x30] sm:$0xff] %v691
      %724 = vst [vmem:[%s231 + $0x38] sm:$0xff] %v692
      %725 = vst [vmem:[%s231 + $0x40] sm:$0xff] %v693
      %726 = vst [vmem:[%s231 + $0x48] sm:$0xff] %v694
      %727 = vst [vmem:[%s231 + $0x50] sm:$0xff] %v695
      %728 = vst [vmem:[%s231 + $0x58] sm:$0xff] %v696
      %729 = vst [vmem:[%s231 + $0x60] sm:$0xff] %v697
      %730 = vst [vmem:[%s231 + $0x68] sm:$0xff] %v698
      %731 = vst [vmem:[%s231 + $0x70] sm:$0xff] %v699
      %732 = vst [vmem:[%s231 + $0x78] sm:$0xff] %v700
      %733 = vst [vmem:[%s231 + $0x80] sm:$0xff] %v701
      %734 = vst [vmem:[%s231 + $0x88] sm:$0xff] %v702
      %735 = vst [vmem:[%s231 + $0x90] sm:$0xff] %v703
      %736 = vst [vmem:[%s231 + $0x98] sm:$0xff] %v704
      %737 = vst [vmem:[%s231 + $0xa0] sm:$0xff] %v705
      %738 = vst [vmem:[%s231 + $0xa8] sm:$0xff] %v706
      %739 = vst [vmem:[%s231 + $0xb0] sm:$0xff] %v707
      %740 = vst [vmem:[%s231 + $0xb8] sm:$0xff] %v708
      %741 = vst [vmem:[%s231 + $0xc0] sm:$0xff] %v709
      %742 = vst [vmem:[%s231 + $0xc8] sm:$0xff] %v710
      %743 = vst [vmem:[%s231 + $0xd0] sm:$0xff] %v711
      %744 = vst [vmem:[%s231 + $0xd8] sm:$0xff] %v712
      %745 = vst [vmem:[%s231 + $0xe0] sm:$0xff] %v713
      %746 = vst [vmem:[%s231 + $0xe8] sm:$0xff] %v714
      %747 = vst [vmem:[%s231 + $0xf0] sm:$0xff] %v715
      %748 = vst [vmem:[%s231 + $0xf8] sm:$0xff] %v716
      %s749 = smul.u32 4, %s16
      %p750 = scmp.lt.s32.totalorder %s749, 7
      %s751 = scalar_select %p750, %s749, 7
      %s752 = smul.addr %s751, 8
      %s753 = smul.addr %s752, 8
      %s754 = scalar_lea.vmem %s5, %s753
      // Predicated region
      $region41: #{se_module_forward.1} parent=39 // pred_check
        %p755 = pneg %p144
      $region42: #{se_module_forward.1} parent=39 // pred_check_branch
        %757 = sbr.rel (%p755) target = $region44
      $region43: #{se_module_forward.1} parent=39 // pred_region
        %s758 = smul.u32 4, %s16
      $region44: #{se_module_forward.1} parent=39 // pred_fallthru
        _
    $region40: #{se_module_forward.1} parent=5 // pred_fallthru
      _
    %p759 = scmp.le.s32.totalorder 2, %s11
    // Predicated region
    $region45: #{se_module_forward.1} parent=5 // pred_check
      %p760 = pneg %p759
    $region46: #{se_module_forward.1} parent=5 // pred_check_branch
      %762 = sbr.rel (%p760) target = $region48
    $region47: #{se_module_forward.1} parent=5 // pred_region
      %s763 = ssub.s32 %s11, 2
      // Predicated region
      $region49: #{se_module_forward.1} parent=47 // pred_check
        %p764 = pneg %p150
      $region50: #{se_module_forward.1} parent=47 // pred_check_branch
        %766 = sbr.rel (%p764) target = $region52
      $region51: #{se_module_forward.1} parent=47 // pred_region
        %s767 = smul.u32 4, %s17
        %p768 = scmp.lt.s32.totalorder %s767, 7
        %s769 = scalar_select %p768, %s767, 7
        %s770 = smul.addr %s769, 8
        %s771 = smul.addr %s770, 8
        %s772 = scalar_lea.vmem %s5, %s771
      $region52: #{se_module_forward.1} parent=47 // pred_fallthru
        _
    $region48: #{se_module_forward.1} parent=5 // pred_fallthru
      _
  $region6: #{se_module_forward.1} parent=0 // loop_footer
    %s15 = sadd.s32 1, %s11
  $region7: #{se_module_forward.1} parent=0 // loop_footer_branch
    %10 = sbr.rel target = $region3
  $region8: #{se_module_forward.1} parent=0 // loop_exit
    _

</llo_original>
